<compile_context>
chip_gen: v7x
topology: tpu7x:2x2x1
jax: 0.10.0
libtpu: 0.0.40
codegen_flags: <defaults>
</compile_context>

<pallas_src>
import functools

import jax
import jax.numpy as jnp
from jax.experimental import pallas as pl
from jax.experimental.pallas import tpu as pltpu


# ----------------------------------------------------------------------------
# Shared elementwise transform (used by both kernels and the fast path)
# ----------------------------------------------------------------------------
def _apply_nonlinearity(a, non_linearity):
    if non_linearity == "exp":
        return jnp.exp(a)                                   # EUP transcendental
    if non_linearity == "elu":
        # F.elu(x) + 1 == where(x > 0, x + 1, exp(x))   (alpha = 1)
        return jnp.where(a > 0, a + 1.0, jnp.exp(a))
    if non_linearity == "none":
        return a
    raise NameError("No non-linearity has been specified")


# ----------------------------------------------------------------------------
# Generation-aware budgets / dtype handling
# ----------------------------------------------------------------------------
@functools.lru_cache(maxsize=None)
def _hw_budgets():
    """Returns (target_block_bytes, vmem_limit_bytes) for this generation."""
    vmem_cap = None
    try:
        vmem_cap = pltpu.get_tpu_info().vmem_capacity_bytes
    except Exception:
        pass
    if vmem_cap is not None and vmem_cap >= 96 * 1024 * 1024:
        # v5e / v6e: 128 MiB VMEM per TensorCore -> 8 MiB blocks, 48 MiB scoped.
        return 8 * 1024 * 1024, 48 * 1024 * 1024
    # v7x (64 MiB per TC) or unknown: conservative 4 MiB blocks, 40 MiB scoped.
    return 4 * 1024 * 1024, 40 * 1024 * 1024


@functools.lru_cache(maxsize=None)
def _is_v5():
    try:
        return "v5" in jax.devices()[0].device_kind.lower()
    except Exception:
        return False


def _compute_dtype(dtype):
    dtype = jnp.dtype(dtype)
    if dtype.itemsize >= 4:
        return dtype
    # Sub-32-bit floats: v6e/v7x have bf16 VPU/EUP -> compute natively (halves
    # the in-kernel working set); v5e has no bf16 VPU/EUP -> upcast to f32.
    return jnp.float32 if _is_v5() else dtype


def _sublane_multiple(dtype):
    # Native sublane packing: 8 rows for 4-byte, 16 for 2-byte, 32 for 1-byte.
    return max(8, 32 // max(1, jnp.dtype(dtype).itemsize))


# ----------------------------------------------------------------------------
# Elementwise streaming kernel: out = f(Adj)
# ----------------------------------------------------------------------------
def _adj_nonlinearity_kernel(adj_ref, out_ref, *, non_linearity, compute_dtype):
    a = adj_ref[...].astype(compute_dtype)
    out_ref[...] = _apply_nonlinearity(a, non_linearity).astype(out_ref.dtype)


def _choose_tiles(n_rows, n_cols, dtype):
    """Pick (tile_rows, tile_cols) near the HBM roofline, with >= 4 grid steps."""
    itemsize = jnp.dtype(dtype).itemsize
    sub = _sublane_multiple(dtype)
    target_block_bytes, _ = _hw_budgets()
    if _compute_dtype(dtype) != jnp.dtype(dtype):
        # In-kernel f32 upcast doubles the working set -> shrink the block.
        target_block_bytes = min(target_block_bytes, 4 * 1024 * 1024)

    # Column tile: full width when modest (full-extent is always legal), else a
    # lane-dense multiple of 128 so stores stay unmasked vst.
    tile_cols = n_cols if n_cols <= 2048 else 2048

    # Row tile: fill the per-block byte budget, rounded to native sublane packing.
    max_rows = max(sub, (target_block_bytes // (tile_cols * itemsize)) // sub * sub)
    tile_rows = n_rows if n_rows <= max_rows else max_rows

    # Guarantee enough grid steps for DMA/compute overlap and for v7x's two
    # TensorCores to both get work (>= 4 total steps, >= 2 along one axis).
    def n_steps(tr, tc):
        return pl.cdiv(n_rows, tr) * pl.cdiv(n_cols, tc)

    while n_steps(tile_rows, tile_cols) < 4 and tile_rows > sub:
        new_rows = max(sub, (tile_rows // 2) // sub * sub)
        if new_rows == tile_rows:
            break
        tile_rows = new_rows
    while (n_steps(tile_rows, tile_cols) < 4 and tile_cols > 128
           and tile_cols % 256 == 0):
        tile_cols //= 2
    return tile_rows, tile_cols


_FAST_PATH_BYTES = 2 * 1024 * 1024   # below this, XLA fused elementwise wins


def full_param_forward(adj, non_linearity, *, force_pallas=False):
    """Pallas equivalent of FullParam.forward (dense / non-sparse path)."""
    if non_linearity == "none":
        return adj                          # identity: no HBM round trip at all
    if non_linearity not in ("exp", "elu"):
        raise NameError("No non-linearity has been specified")

    n_rows, n_cols = adj.shape
    itemsize = jnp.dtype(adj.dtype).itemsize
    nbytes = n_rows * n_cols * itemsize

    if nbytes < _FAST_PATH_BYTES and not force_pallas:
        # Small-matrix fast path: custom-call dispatch + pipeline prologue
        # (~0.35 us/step) would dominate; XLA hits the same HBM roofline.
        return _apply_nonlinearity(adj, non_linearity).astype(adj.dtype)

    tile_rows, tile_cols = _choose_tiles(n_rows, n_cols, adj.dtype)
    grid = (pl.cdiv(n_rows, tile_rows), pl.cdiv(n_cols, tile_cols))
    _, vmem_limit = _hw_budgets()

    kernel = functools.partial(
        _adj_nonlinearity_kernel,
        non_linearity=non_linearity,
        compute_dtype=_compute_dtype(adj.dtype),
    )
    cost = pl.CostEstimate(
        flops=n_rows * n_cols,
        transcendentals=n_rows * n_cols,
        bytes_accessed=2 * nbytes,
    )
    return pl.pallas_call(
        kernel,
        out_shape=jax.ShapeDtypeStruct((n_rows, n_cols), adj.dtype),
        grid_spec=pltpu.PrefetchScalarGridSpec(
            num_scalar_prefetch=0,
            grid=grid,
            in_specs=[pl.BlockSpec((tile_rows, tile_cols), lambda i, j: (i, j))],
            out_specs=pl.BlockSpec((tile_rows, tile_cols), lambda i, j: (i, j)),
        ),
        compiler_params=pltpu.CompilerParams(
            # Both axes parallel -> v7x's two TensorCores shard the grid;
            # measured no-op on single-TC v5e/v6e.
            dimension_semantics=("parallel", "parallel"),
            vmem_limit_bytes=vmem_limit,
        ),
        cost_estimate=cost,
    )(adj)


# ----------------------------------------------------------------------------
# Fused consumer kernel: out = f(Adj) @ H  (f(Adj) never written to HBM)
# ----------------------------------------------------------------------------
def _fused_adj_matmul_kernel(adj_ref, h_ref, out_ref, acc_ref, *, non_linearity):
    @pl.when(pl.program_id(1) == 0)
    def _():
        acc_ref[...] = jnp.zeros_like(acc_ref)

    a = _apply_nonlinearity(adj_ref[...].astype(jnp.float32), non_linearity)
    acc_ref[...] += jnp.dot(a.astype(adj_ref.dtype), h_ref[...],
                            preferred_element_type=jnp.float32)

    @pl.when(pl.program_id(1) == pl.num_programs(1) - 1)
    def _():
        out_ref[...] = acc_ref[...].astype(out_ref.dtype)


def fused_adjacency_matmul(adj, h, non_linearity, *, tm=256, tk=256):
    """f(Adj) @ H with the nonlinearity applied tile-by-tile inside the matmul."""
    if non_linearity not in ("exp", "elu", "none"):
        raise NameError("No non-linearity has been specified")
    n, k = adj.shape
    k2, f = h.shape
    assert k == k2, "shape mismatch between Adj and H"
    tm = min(tm, n)
    tk = min(tk, k)
    if (n % tm) or (k % tk):
        # Keep reduction edge blocks exact: fall back to unfused path.
        a32 = _apply_nonlinearity(adj.astype(jnp.float32), non_linearity)
        return jnp.dot(a32, h.astype(jnp.float32)).astype(h.dtype)

    grid = (n // tm, k // tk)
    _, vmem_limit = _hw_budgets()
    kernel = functools.partial(_fused_adj_matmul_kernel,
                               non_linearity=non_linearity)
    itemsize = jnp.dtype(adj.dtype).itemsize
    cost = pl.CostEstimate(
        flops=2 * n * k * f + n * k,
        transcendentals=n * k,
        bytes_accessed=(n * k + k * f + n * f) * itemsize,
    )
    return pl.pallas_call(
        kernel,
        out_shape=jax.ShapeDtypeStruct((n, f), h.dtype),
        grid_spec=pltpu.PrefetchScalarGridSpec(
            num_scalar_prefetch=0,
            grid=grid,
            in_specs=[pl.BlockSpec((tm, tk), lambda i, kk: (i, kk)),
                      pl.BlockSpec((tk, f), lambda i, kk: (kk, 0))],
            out_specs=pl.BlockSpec((tm, f), lambda i, kk: (i, 0)),
            scratch_shapes=[pltpu.VMEM((tm, f), jnp.float32)],
        ),
        compiler_params=pltpu.CompilerParams(
            dimension_semantics=("parallel", "arbitrary"),
            vmem_limit_bytes=vmem_limit,
        ),
        cost_estimate=cost,
    )(adj, h)


# ----------------------------------------------------------------------------
# Deterministic parameter initialization (synthetic stand-in for the
# nearest_neighbors_pre_* numpy helpers used in __init__).
# ----------------------------------------------------------------------------
def nearest_neighbors_pre_exp_init(features, k):
    """Cosine-similarity kNN adjacency with non-neighbor logits pushed very
    negative so exp() in forward zeroes them out (mirrors pre_exp)."""
    f = features / (jnp.linalg.norm(features, axis=-1, keepdims=True) + 1e-8)
    sim = f @ f.T
    kth = jnp.sort(sim, axis=-1)[:, -k][:, None]
    mask = sim >= kth
    neg = jnp.full_like(sim, -30.0)                       # exp(-30) ~ 0
    return jnp.where(mask, sim, neg).astype(jnp.float32)


# ----------------------------------------------------------------------------
# Pure-JAX references for correctness checks
# ----------------------------------------------------------------------------
def full_param_forward_ref(adj, non_linearity):
    if non_linearity == "exp":
        return jnp.exp(adj)
    elif non_linearity == "elu":
        return jnp.where(adj > 0, adj, jnp.exp(adj) - 1.0) + 1.0
    elif non_linearity == "none":
        return adj
    raise NameError("No non-linearity has been specified")


if __name__ == "__main__":
    key = jax.random.PRNGKey(0)
    k_feat_s, k_feat_l, k_h = jax.random.split(key, 3)

    failures = []

    def check(name, got, want, rtol, atol):
        got = jax.block_until_ready(got)
        if not jnp.allclose(got, want, rtol=rtol, atol=atol):
            failures.append(name)
            print(f"MISMATCH: {name}")

    # ---- small adjacency (N=128): fast path + forced-Pallas sanity check ----
    N_S, F, K = 128, 16, 8
    feats_s = jax.random.normal(k_feat_s, (N_S, F), dtype=jnp.float32)
    adj_s = nearest_neighbors_pre_exp_init(feats_s, K)
    for nl in ("exp", "elu", "none"):
        check(f"small/{nl}", full_param_forward(adj_s, nl),
              full_param_forward_ref(adj_s, nl), 1e-5, 1e-5)
    check("small/exp/pallas",
          full_param_forward(adj_s, "exp", force_pallas=True),
          full_param_forward_ref(adj_s, "exp"), 1e-5, 1e-5)

    # ---- larger adjacency (N=1024, 4 MiB f32): Pallas streaming kernel ----
    N_L = 1024
    feats_l = jax.random.normal(k_feat_l, (N_L, F), dtype=jnp.float32)
    adj_l = nearest_neighbors_pre_exp_init(feats_l, K)
    for nl in ("exp", "elu", "none"):
        check(f"large/{nl}", full_param_forward(adj_l, nl),
              full_param_forward_ref(adj_l, nl), 1e-5, 1e-5)

    # ---- fused consumer: f(Adj) @ H without materializing f(Adj) to HBM ----
    h = jax.random.normal(k_h, (N_L, F), dtype=jnp.float32)   # module ignores h;
    # the fused kernel shows how the downstream graph-conv should consume Adj.
    for nl in ("exp", "elu"):
        fused = fused_adjacency_matmul(adj_l, h, nl)
        ref = jnp.dot(full_param_forward_ref(adj_l, nl), h,
                      precision=jax.lax.Precision.HIGHEST)
        # Loose tolerance: MXU matmul precision may differ from HIGHEST ref.
        check(f"fused/{nl}", fused, ref, 2e-2, 1e-1)

    # TODO(synk): sparse COO path (Adj.coalesce() + values-only transform) has
    # no dense-Pallas equivalent; only the dense (sparse=False) path is kerneled.

    if not failures:
        print("KERNEL_OK")
</pallas_src>

<mosaic_0001>
module attributes {stable_mosaic.version = 11 : i64} {
  func.func @_adj_nonlinearity_kernel(%arg0: i32, %arg1: i32, %arg2: memref<32x128xf32, #tpu.memory_space<vmem>>, %arg3: memref<32x128xf32, #tpu.memory_space<vmem>>) attributes {dimension_semantics = [#tpu.dimension_semantics<parallel>, #tpu.dimension_semantics<parallel>], iteration_bounds = array<i64: 4, 1>, scalar_prefetch = 0 : i64, scratch_operands = 0 : i64, tpu.core_type = #tpu.core_type<tc>, window_params = [{transform_indices = @transform_0, window_bounds = array<i64: 32, 128>}, {transform_indices = @transform_1, window_bounds = array<i64: 32, 128>}]} {
    %c0 = arith.constant 0 : index
    %c0_0 = arith.constant 0 : index
    %0 = vector.load %arg2[%c0, %c0_0] : memref<32x128xf32, #tpu.memory_space<vmem>>, vector<32x128xf32>
    %1 = math.exp %0 : vector<32x128xf32>
    %c0_1 = arith.constant 0 : index
    %c0_2 = arith.constant 0 : index
    %2 = vector.load %arg3[%c0_1, %c0_2] : memref<32x128xf32, #tpu.memory_space<vmem>>, vector<32x128xf32>
    tpu.vector_store %arg3[%c0_1, %c0_2], %1 {strides = array<i32>} : memref<32x128xf32, #tpu.memory_space<vmem>>, vector<32x128xf32>,
    return
  }
  func.func @transform_0(%arg0: i32, %arg1: i32) -> (i32, i32) {
    %c0_i32 = arith.constant 0 : i32
    return %arg0, %arg1 : i32, i32
  }
  func.func @transform_1(%arg0: i32, %arg1: i32) -> (i32, i32) {
    %c0_i32 = arith.constant 0 : i32
    return %arg0, %arg1 : i32, i32
  }
}

</mosaic_0001>

<llo_original>
// kernel: tpu_custom_call.1
$region0: #{tpu_custom_call.1}
  #allocation0 [shape = 'u32[]', space=smem, size = 0x4, offset = 0x4, fixed_abs, tag = 'smem constant byte address 0x4 - core index']
  #allocation1 [shape = 'u32[144,128]{1,0:T(1,128)}', space=vmem, size = 0x12000, scoped, tag = 'internal scratch']
  %s0 = inlined_call_operand.hbm [shape: f32[128,128], index: 0, kind: input, shape index: {}]
  %s1 = inlined_call_operand.hbm [shape: f32[128,128], index: 1, kind: output, shape index: {}]
  %s2 = sld [smem:[#allocation0]]
  $region41: #{tpu_custom_call.1} parent=0
    _
  %s4 = ssub.s32 1, %s2
  %s5 = scalar_select 0, %s4, %s2
  $region1: #{tpu_custom_call.1} parent=0
    #allocation2 [shape = 'u8[32768]{0}', space=vmem, size = 0x8000, scoped, tag = 'input window, operand 0']
    #allocation3 [shape = 's32[2]{0}', space=sflag, size = 0x8, scoped, tag = 'scoped memory for tpu_custom_call.1']
    #allocation4 [shape = 's32[2]{0}', space=sflag, size = 0x8, scoped, tag = 'scoped memory for tpu_custom_call.1']
    #allocation5 [shape = 'u8[32768]{0}', space=vmem, size = 0x8000, scoped, tag = 'output window, operand 0']
    %6 = vsyncpa [#allocation3], 0
    %s7 = scalar_lea.sflag [#allocation3], 1
    %8 = vsyncpa %s7, 0
    %9 = vsyncpa [#allocation4], 0
    %s10 = scalar_lea.sflag [#allocation4], 1
    %11 = vsyncpa %s10, 0
    loop: start=0, step=1, limit=6
    $region2: #{tpu_custom_call.1} parent=1 // loop_pre_header
      _
    $region3: #{tpu_custom_call.1} parent=1 // loop_header
      %s13 = sphi 0, %s17
      %p14 = scmp.ge.s32.totalorder %s13, 6
      %s20 = sphi 0, %s32
      %s21 = sphi 0, %s28
      %s22 = sphi 0, %s20
      %s23 = sphi 0, %s21
      %s24 = sphi 0, %s22
      %s25 = sphi 0, %s23
      %s37 = sphi 0, %s39
      %s40 = sphi 0, %s37
      %s41 = sphi 0, %s40
      %s57 = sphi 0, %s41
      %s65 = sphi 0, %s67
      %s68 = sphi 0, %s65
      %s69 = sphi 0, %s68
      %s85 = sphi 0, %s69
    $region4: #{tpu_custom_call.1} parent=1 // loop_header_branch
      %16 = sbr.rel (%p14) target = $region8
    $region5: #{tpu_custom_call.1} parent=1 // loop_body
      %s18 = ssub.s32 %s13, 1
      %s19 = ssub.s32 %s13, 2
      %s26 = sadd.s32 1, %s21
      %p27 = scmp.ge.s32.totalorder %s26, 1
      %s28 = scalar_select %p27, 0, %s26
      %s29 = sadd.s32 1, %s20
      %s30 = scalar_select %p27, %s29, %s20
      %p31 = scmp.ge.s32.totalorder %s30, 4
      %s32 = scalar_select %p31, 0, %s30
      %s33 = ssub.s32 %s20, %s32
      %s34 = ssub.s32 %s21, %s28
      %s35 = sor.u32 %s33, %s34
      %p36 = scmp.eq.s32.totalorder %s35, 0
      %s38 = sadd.s32 %s37, 1
      %s39 = scalar_select %p36, %s37, %s38
      %p42 = pneg %p36
      %p43 = scmp.eq.s32.totalorder %s13, 3
      %p44 = por %p42, %p43
      %p45 = scmp.ne.s32.totalorder %s37, %s40
      %p46 = scmp.eq.s32.totalorder %s13, 0
      %p47 = por %p45, %p46
      %p48 = scmp.ne.s32.totalorder %s37, %s40
      %p49 = scmp.eq.s32.totalorder %s18, 3
      %p50 = por %p48, %p49
      %p51 = scmp.ne.s32.totalorder %s40, %s41
      %p52 = scmp.eq.s32.totalorder %s18, 0
      %p53 = por %p51, %p52
      %p54 = scmp.ne.s32.totalorder %s40, %s41
      %p55 = scmp.eq.s32.totalorder %s19, 3
      %p56 = por %p54, %p55
      %p58 = scmp.ne.s32.totalorder %s41, %s57
      %p59 = scmp.eq.s32.totalorder %s19, 0
      %p60 = por %p58, %p59
      %s61 = ssub.s32 %s20, %s32
      %s62 = ssub.s32 %s21, %s28
      %s63 = sor.u32 %s61, %s62
      %p64 = scmp.eq.s32.totalorder %s63, 0
      %s66 = sadd.s32 %s65, 1
      %s67 = scalar_select %p64, %s65, %s66
      %p70 = pneg %p64
      %p71 = scmp.eq.s32.totalorder %s13, 3
      %p72 = por %p70, %p71
      %p73 = scmp.ne.s32.totalorder %s65, %s68
      %p74 = scmp.eq.s32.totalorder %s13, 0
      %p75 = por %p73, %p74
      %p76 = scmp.ne.s32.totalorder %s65, %s68
      %p77 = scmp.eq.s32.totalorder %s18, 3
      %p78 = por %p76, %p77
      %p79 = scmp.ne.s32.totalorder %s68, %s69
      %p80 = scmp.eq.s32.totalorder %s18, 0
      %p81 = por %p79, %p80
      %p82 = scmp.ne.s32.totalorder %s68, %s69
      %p83 = scmp.eq.s32.totalorder %s19, 3
      %p84 = por %p82, %p83
      %p86 = scmp.ne.s32.totalorder %s69, %s85
      %p87 = scmp.eq.s32.totalorder %s19, 0
      %p88 = por %p86, %p87
      %p89 = scmp.le.s32.totalorder 1, %s13
      %p90 = scmp.lt.s32.totalorder %s13, 5
      %p91 = pnand %p89, %p90
      %p92 = pneg %p91
      // Predicated region
      $region9: #{tpu_custom_call.1} parent=5 // pred_check
        _
      $region10: #{tpu_custom_call.1} parent=5 // pred_check_branch
        %94 = sbr.rel (%p91) target = $region12
      $region11: #{tpu_custom_call.1} parent=5 // pred_region
        %s95 = ssub.s32 %s13, 1
      $region12: #{tpu_custom_call.1} parent=5 // pred_fallthru
        _
      %p96 = scmp.lt.s32.totalorder %s13, 4
      // Predicated region
      $region13: #{tpu_custom_call.1} parent=5 // pred_check
        %p97 = pneg %p96
      $region14: #{tpu_custom_call.1} parent=5 // pred_check_branch
        %99 = sbr.rel (%p97) target = $region16
      $region15: #{tpu_custom_call.1} parent=5 // pred_region
        // Predicated region
        $region17: #{tpu_custom_call.1} parent=15 // pred_check
          %p100 = pneg %p47
        $region18: #{tpu_custom_call.1} parent=15 // pred_check_branch
          %102 = sbr.rel (%p100) target = $region20
        $region19: #{tpu_custom_call.1} parent=15 // pred_region
          %s103 = sand.u32 %s37, 1
          %s104 = scalar_lea.sflag [#allocation3], %s103
          %s105 = sand.u32 %s37, 1
          %s106 = smul.addr %s105, 32
          %s107 = scalar_lea.vmem [#allocation2], %s106
          %s108 = smul.u32 4, %s20
          %s110 = ssub.s32 512, 512
          %111 = vsyncadd %s104, %s110
          %s112 = sadd.s32 %s21, %s108
          %s113 = smul.addr %s112, 128
          %s114 = scalar_lea.hbm %s0, %s113
          %s115 = sshll.u32 %s107, 4
          %s116 = int_to_ptr.vmem [resolvable:$true] %s115
          %121 = dma.hbm_to_vmem [thread:$0]  %s114, 512, %s116, %s104, 128, 128, 8
        $region20: #{tpu_custom_call.1} parent=15 // pred_fallthru
          _
      $region16: #{tpu_custom_call.1} parent=5 // pred_fallthru
        _
      %p122 = scmp.le.s32.totalorder 1, %s13
      %p123 = scmp.lt.s32.totalorder %s13, 5
      %p124 = pnand %p122, %p123
      %p125 = pneg %p124
      // Predicated region
      $region21: #{tpu_custom_call.1} parent=5 // pred_check
        _
      $region22: #{tpu_custom_call.1} parent=5 // pred_check_branch
        %127 = sbr.rel (%p124) target = $region24
      $region23: #{tpu_custom_call.1} parent=5 // pred_region
        %s128 = ssub.s32 %s13, 1
        %s129 = sand.u32 %s40, 1
        %s130 = scalar_lea.sflag [#allocation3], %s129
        %s131 = sand.u32 %s40, 1
        %s132 = smul.addr %s131, 32
        %s133 = scalar_lea.vmem [#allocation2], %s132
        // Predicated region
        $region25: #{tpu_custom_call.1} parent=23 // pred_check
          %p134 = pneg %p53
        $region26: #{tpu_custom_call.1} parent=23 // pred_check_branch
          %136 = sbr.rel (%p134) target = $region28
        $region27: #{tpu_custom_call.1} parent=23 // pred_region
          %137 = dma.done %s130, 512
        $region28: #{tpu_custom_call.1} parent=23 // pred_fallthru
          _
        %s138 = sand.u32 %s40, 1
        %s139 = scalar_lea.sflag [#allocation3], %s138
        %s140 = sand.u32 %s40, 1
        %s141 = smul.addr %s140, 32
        %s142 = scalar_lea.vmem [#allocation2], %s141
        %p143 = pneg %p53
        %p144 = pneg %p50
        %p145 = pneg %p81
        %p146 = pneg %p78
        %s147 = sand.u32 %s68, 1
        %s148 = scalar_lea.sflag [#allocation4], %s147
        %s149 = sand.u32 %s68, 1
        %s150 = smul.addr %s149, 32
        %s151 = scalar_lea.vmem [#allocation5], %s150
        %s152 = smul.u32 4, %s22
        %s153 = smul.u32 4, %s22
        %v154 = vld [vmem:[%s133] sm:$0xff]
        %v155 = vld [vmem:[%s133 + $0x8] sm:$0xff]
        %v156 = vld [vmem:[%s133 + $0x10] sm:$0xff]
        %v157 = vld [vmem:[%s133 + $0x18] sm:$0xff]
        %v158 = vmul.f32 %v154, 1.442695
        %v159 = vpow.pop %v158
        %v160 = vmul.f32 %v155, 1.442695
        %v161 = vpow.pop %v160
        %v162 = vmul.f32 %v156, 1.442695
        %v163 = vpow.pop %v162
        %v164 = vmul.f32 %v157, 1.442695
        %v165 = vpow.pop %v164
        %166 = vst [vmem:[%s151] sm:$0xff] %v159
        %167 = vst [vmem:[%s151 + $0x8] sm:$0xff] %v161
        %168 = vst [vmem:[%s151 + $0x10] sm:$0xff] %v163
        %169 = vst [vmem:[%s151 + $0x18] sm:$0xff] %v165
        %s170 = sand.u32 %s68, 1
        %s171 = scalar_lea.sflag [#allocation4], %s170
        %s172 = sand.u32 %s68, 1
        %s173 = smul.addr %s172, 32
        %s174 = scalar_lea.vmem [#allocation5], %s173
        // Predicated region
        $region29: #{tpu_custom_call.1} parent=23 // pred_check
          %p175 = pneg %p78
        $region30: #{tpu_custom_call.1} parent=23 // pred_check_branch
          %177 = sbr.rel (%p175) target = $region32
        $region31: #{tpu_custom_call.1} parent=23 // pred_region
          %s178 = smul.u32 4, %s22
          %s180 = ssub.s32 512, 512
          %181 = vsyncadd %s171, %s180
          %s182 = sadd.s32 %s23, %s178
          %s183 = smul.addr %s182, 128
          %s184 = scalar_lea.hbm %s1, %s183
          %s185 = sshll.u32 %s174, 4
          %s186 = int_to_ptr.vmem [resolvable:$true] %s185
          %191 = dma.vmem_to_hbm [thread:$0]  %s186, 512, %s184, %s171, 128, 128, 8
        $region32: #{tpu_custom_call.1} parent=23 // pred_fallthru
          _
      $region24: #{tpu_custom_call.1} parent=5 // pred_fallthru
        _
      %p192 = scmp.le.s32.totalorder 2, %s13
      // Predicated region
      $region33: #{tpu_custom_call.1} parent=5 // pred_check
        %p193 = pneg %p192
      $region34: #{tpu_custom_call.1} parent=5 // pred_check_branch
        %195 = sbr.rel (%p193) target = $region36
      $region35: #{tpu_custom_call.1} parent=5 // pred_region
        %s196 = ssub.s32 %s13, 2
        // Predicated region
        $region37: #{tpu_custom_call.1} parent=35 // pred_check
          %p197 = pneg %p84
        $region38: #{tpu_custom_call.1} parent=35 // pred_check_branch
          %199 = sbr.rel (%p197) target = $region40
        $region39: #{tpu_custom_call.1} parent=35 // pred_region
          %s200 = sand.u32 %s69, 1
          %s201 = scalar_lea.sflag [#allocation4], %s200
          %s202 = sand.u32 %s69, 1
          %s203 = smul.addr %s202, 32
          %s204 = scalar_lea.vmem [#allocation5], %s203
          %205 = dma.done %s201, 512
        $region40: #{tpu_custom_call.1} parent=35 // pred_fallthru
          _
      $region36: #{tpu_custom_call.1} parent=5 // pred_fallthru
        _
    $region6: #{tpu_custom_call.1} parent=1 // loop_footer
      %s17 = sadd.s32 1, %s13
    $region7: #{tpu_custom_call.1} parent=1 // loop_footer_branch
      %12 = sbr.rel target = $region3
    $region8: #{tpu_custom_call.1} parent=1 // loop_exit
      _
    %206 = vsyncpa [#allocation3], 1
    %s207 = scalar_lea.sflag [#allocation3], 1
    %208 = vsyncpa %s207, 1
    %209 = vsyncpa [#allocation4], 1
    %s210 = scalar_lea.sflag [#allocation4], 1
    %211 = vsyncpa %s210, 1

</llo_original>
